<compile_context>
chip_gen: v7x
topology: tpu7x:2x2x1
jax: 0.10.0
libtpu: 0.0.40
codegen_flags: <defaults>
</compile_context>

<pallas_src>
import functools

import jax
import jax.numpy as jnp
from jax.experimental import pallas as pl
from jax.experimental.pallas import tpu as pltpu

# ----------------------------- toy dimensions --------------------------------
B = 2        # batch
S = 8        # sequence length
H = 32       # BERT hidden size
C = 16       # linear (projection head) output dim
V = 100      # toy vocab size
NTYPES = 2   # token type vocab

LANE = 128   # TPU lane width
SUBLANE = 8  # TPU sublane width


def _round_up(x, m):
    return (x + m - 1) // m * m


# ------------------------------ Pallas kernel --------------------------------
def protonet_head_kernel(cls_ref, wp_ref, bp_ref, wl_ref, bl_ref, out_ref):
    """Fused pooler(dense + tanh) -> dropout(identity) -> linear, one batch tile.

    cls_ref : [TB, H]      bf16  CLS-token hidden states (batch tile)
    wp_ref  : [H, H]       bf16  pooler weight  (in, out)
    bp_ref  : [1, H]       f32   pooler bias
    wl_ref  : [H, C_pad]   bf16  linear weight  (in, out), lane-padded
    bl_ref  : [1, C_pad]   f32   linear bias, lane-padded
    out_ref : [TB, C_pad]  f32
    """
    # bf16 x bf16 on the MXU with f32 accumulation; epilogue stays f32.
    pooled = jnp.tanh(
        jnp.dot(cls_ref[...], wp_ref[...], preferred_element_type=jnp.float32)
        + bp_ref[...]
    )
    # dropout: module is evaluated in inference mode -> identity.
    out = (
        jnp.dot(pooled.astype(jnp.bfloat16), wl_ref[...],
                preferred_element_type=jnp.float32)
        + bl_ref[...]
    )
    out_ref[...] = out


@functools.partial(jax.jit, static_argnames=("block_b",))
def protonet_head(cls_hidden, w_pool, b_pool, w_lin, b_lin, *, block_b=128):
    """Pad + tile wrapper around the fused head kernel."""
    b, h = cls_hidden.shape
    c = w_lin.shape[1]

    # Lane-dense output: pad projection dim up to a multiple of 128.
    c_pad = _round_up(c, LANE)
    # MXU-friendly batch tile (128 rows) when the batch is large enough,
    # otherwise just the padded (sublane-multiple) batch.
    tb = min(block_b, _round_up(b, SUBLANE))
    b_pad = _round_up(b, tb)

    cls_p = jnp.zeros((b_pad, h), jnp.bfloat16).at[:b].set(
        cls_hidden.astype(jnp.bfloat16))
    w_lin_p = jnp.zeros((h, c_pad), jnp.bfloat16).at[:, :c].set(
        w_lin.astype(jnp.bfloat16))
    b_lin_p = jnp.zeros((1, c_pad), jnp.float32).at[:, :c].set(
        b_lin.astype(jnp.float32))

    out = pl.pallas_call(
        protonet_head_kernel,
        out_shape=jax.ShapeDtypeStruct((b_pad, c_pad), jnp.float32),
        grid=(b_pad // tb,),
        in_specs=[
            pl.BlockSpec((tb, h), lambda i: (i, 0)),       # activations stream
            pl.BlockSpec((h, h), lambda i: (0, 0)),        # weights stay resident
            pl.BlockSpec((1, h), lambda i: (0, 0)),
            pl.BlockSpec((h, c_pad), lambda i: (0, 0)),
            pl.BlockSpec((1, c_pad), lambda i: (0, 0)),
        ],
        out_specs=pl.BlockSpec((tb, c_pad), lambda i: (i, 0)),
        compiler_params=pltpu.CompilerParams(
            dimension_semantics=("parallel",)),            # 2-TC sharding on v7x
    )(cls_p, w_pool.astype(jnp.bfloat16), b_pool.astype(jnp.float32),
      w_lin_p, b_lin_p)

    return out[:b, :c]


# ------------------------------ JAX glue --------------------------------------
def init_params(key):
    ks = jax.random.split(key, 8)
    scale = 0.02
    return {
        "word_emb": scale * jax.random.normal(ks[0], (V, H), jnp.float32),
        "pos_emb": scale * jax.random.normal(ks[1], (S, H), jnp.float32),
        "type_emb": scale * jax.random.normal(ks[2], (NTYPES, H), jnp.float32),
        "ln_gamma": jnp.ones((H,), jnp.float32),
        "ln_beta": jnp.zeros((H,), jnp.float32),
        # MXU operands stored in bf16; biases kept f32 for the epilogue.
        "w_pool": (scale * jax.random.normal(ks[3], (H, H), jnp.float32)
                   ).astype(jnp.bfloat16),
        "b_pool": jnp.zeros((1, H), jnp.float32),
        "w_lin": (scale * jax.random.normal(ks[4], (H, C), jnp.float32)
                  ).astype(jnp.bfloat16),
        "b_lin": jnp.zeros((1, C), jnp.float32),
    }


def bert_cls_embedding(params, input_ids, token_type_ids):
    """Embedding lookup + layernorm for only the CLS (position 0) token."""
    cls_ids = input_ids[:, 0]
    cls_types = token_type_ids[:, 0]
    emb = (params["word_emb"][cls_ids]
           + params["pos_emb"][0][None, :]
           + params["type_emb"][cls_types])
    mean = emb.mean(-1, keepdims=True)
    var = ((emb - mean) ** 2).mean(-1, keepdims=True)
    emb = (emb - mean) * jax.lax.rsqrt(var + 1e-12)
    return emb * params["ln_gamma"] + params["ln_beta"]   # [B, H]


def protonet_classifier_forward(params, batch, start=None, end=None):
    """Mirrors ProtoNetClassifier.forward semantics (eval mode)."""
    start = 0 if start is None else start
    end = batch["input_ids"].shape[0] if end is None else end
    assert start >= 0 and start < end

    arg_list = ["input_ids", "attention_mask", "token_type_ids"]
    sliced = {k: v[start:end] for k, v in batch.items() if k in arg_list}

    # TODO(synk): the BERT transformer encoder layers are not defined in the
    # provided module snippet; only embeddings + pooler + projection head are
    # reproduced here.
    cls_hidden = bert_cls_embedding(
        params, sliced["input_ids"], sliced["token_type_ids"])

    return protonet_head(cls_hidden, params["w_pool"], params["b_pool"],
                         params["w_lin"], params["b_lin"])


def protonet_head_reference(cls_hidden, w_pool, b_pool, w_lin, b_lin):
    """Pure-JAX reference with the same bf16 rounding points as the kernel."""
    cls = cls_hidden.astype(jnp.bfloat16).astype(jnp.float32)
    pooled = jnp.tanh(cls @ w_pool.astype(jnp.float32) + b_pool)
    pooled = pooled.astype(jnp.bfloat16).astype(jnp.float32)
    return pooled @ w_lin.astype(jnp.float32) + b_lin


if __name__ == "__main__":
    key = jax.random.PRNGKey(0)
    pkey, ikey = jax.random.split(key)
    params = init_params(pkey)

    batch = {
        "input_ids": jax.random.randint(ikey, (B, S), 0, V, dtype=jnp.int32),
        "attention_mask": jnp.ones((B, S), jnp.int32),
        "token_type_ids": jnp.zeros((B, S), jnp.int32),
    }

    out = protonet_classifier_forward(params, batch)
    jax.block_until_ready(out)
    assert out.shape == (B, C) and out.dtype == jnp.float32

    # Numerical check against a pure-JAX reference of the same head.
    cls_hidden = bert_cls_embedding(params, batch["input_ids"],
                                    batch["token_type_ids"])
    ref = protonet_head_reference(cls_hidden, params["w_pool"],
                                  params["b_pool"], params["w_lin"],
                                  params["b_lin"])
    assert jnp.allclose(out, ref, rtol=2e-2, atol=2e-2), \
        float(jnp.max(jnp.abs(out - ref)))

    print("KERNEL_OK")
</pallas_src>

<mosaic_0001>
module attributes {stable_mosaic.version = 11 : i64} {
  func.func @protonet_head_kernel(%arg0: i32, %arg1: memref<8x32xbf16, #tpu.memory_space<vmem>>, %arg2: memref<32x32xbf16, #tpu.memory_space<vmem>>, %arg3: memref<1x32xf32, #tpu.memory_space<vmem>>, %arg4: memref<32x128xbf16, #tpu.memory_space<vmem>>, %arg5: memref<1x128xf32, #tpu.memory_space<vmem>>, %arg6: memref<8x128xf32, #tpu.memory_space<vmem>>) attributes {dimension_semantics = [#tpu.dimension_semantics<parallel>], iteration_bounds = array<i64: 1>, scalar_prefetch = 0 : i64, scratch_operands = 0 : i64, tpu.core_type = #tpu.core_type<tc>, window_params = [{transform_indices = @transform_0, window_bounds = array<i64: 8, 32>}, {pipeline_mode = #tpu.pipeline_mode<synchronous>, transform_indices = @transform_1, window_bounds = array<i64: 32, 32>}, {pipeline_mode = #tpu.pipeline_mode<synchronous>, transform_indices = @transform_2, window_bounds = array<i64: 1, 32>}, {pipeline_mode = #tpu.pipeline_mode<synchronous>, transform_indices = @transform_3, window_bounds = array<i64: 32, 128>}, {pipeline_mode = #tpu.pipeline_mode<synchronous>, transform_indices = @transform_4, window_bounds = array<i64: 1, 128>}, {transform_indices = @transform_5, window_bounds = array<i64: 8, 128>}]} {
    %c0 = arith.constant 0 : index
    %c0_0 = arith.constant 0 : index
    %0 = vector.load %arg1[%c0, %c0_0] : memref<8x32xbf16, #tpu.memory_space<vmem>>, vector<8x32xbf16>
    %c0_1 = arith.constant 0 : index
    %c0_2 = arith.constant 0 : index
    %1 = vector.load %arg2[%c0_1, %c0_2] : memref<32x32xbf16, #tpu.memory_space<vmem>>, vector<32x32xbf16>
    %cst = arith.constant dense<0.000000e+00> : vector<8x32xf32>
    %2 = tpu.matmul %0, %1, %cst {dimension_numbers = #tpu.dot_dimension_numbers<[1], [0], [0], [1], [0, 0, 1, 1], [], []>} : vector<8x32xbf16>, vector<32x32xbf16>, vector<8x32xf32> -> vector<8x32xf32>
    %c0_3 = arith.constant 0 : index
    %c0_4 = arith.constant 0 : index
    %3 = vector.load %arg3[%c0_3, %c0_4] : memref<1x32xf32, #tpu.memory_space<vmem>>, vector<1x32xf32>
    %4 = vector.broadcast %3 : vector<1x32xf32> to vector<8x32xf32>
    %5 = arith.addf %2, %4 : vector<8x32xf32>
    %6 = math.tanh %5 : vector<8x32xf32>
    %7 = arith.truncf %6 : vector<8x32xf32> to vector<8x32xbf16>
    %c0_5 = arith.constant 0 : index
    %c0_6 = arith.constant 0 : index
    %8 = vector.load %arg4[%c0_5, %c0_6] : memref<32x128xbf16, #tpu.memory_space<vmem>>, vector<32x128xbf16>
    %cst_7 = arith.constant dense<0.000000e+00> : vector<8x128xf32>
    %9 = tpu.matmul %7, %8, %cst_7 {dimension_numbers = #tpu.dot_dimension_numbers<[1], [0], [0], [1], [0, 0, 1, 1], [], []>} : vector<8x32xbf16>, vector<32x128xbf16>, vector<8x128xf32> -> vector<8x128xf32>
    %c0_8 = arith.constant 0 : index
    %c0_9 = arith.constant 0 : index
    %10 = vector.load %arg5[%c0_8, %c0_9] : memref<1x128xf32, #tpu.memory_space<vmem>>, vector<1x128xf32>
    %11 = vector.broadcast %10 : vector<1x128xf32> to vector<8x128xf32>
    %12 = arith.addf %9, %11 : vector<8x128xf32>
    %c0_10 = arith.constant 0 : index
    %c0_11 = arith.constant 0 : index
    %13 = vector.load %arg6[%c0_10, %c0_11] : memref<8x128xf32, #tpu.memory_space<vmem>>, vector<8x128xf32>
    tpu.vector_store %arg6[%c0_10, %c0_11], %12 {strides = array<i32>} : memref<8x128xf32, #tpu.memory_space<vmem>>, vector<8x128xf32>,
    return
  }
  func.func @transform_0(%arg0: i32) -> (i32, i32) {
    %c0_i32 = arith.constant 0 : i32
    %c0_i32_0 = arith.constant 0 : i32
    return %arg0, %c0_i32 : i32, i32
  }
  func.func @transform_1(%arg0: i32) -> (i32, i32) {
    %c0_i32 = arith.constant 0 : i32
    %c0_i32_0 = arith.constant 0 : i32
    %c0_i32_1 = arith.constant 0 : i32
    return %c0_i32, %c0_i32_0 : i32, i32
  }
  func.func @transform_2(%arg0: i32) -> (i32, i32) {
    %c0_i32 = arith.constant 0 : i32
    %c0_i32_0 = arith.constant 0 : i32
    %c0_i32_1 = arith.constant 0 : i32
    return %c0_i32, %c0_i32_0 : i32, i32
  }
  func.func @transform_3(%arg0: i32) -> (i32, i32) {
    %c0_i32 = arith.constant 0 : i32
    %c0_i32_0 = arith.constant 0 : i32
    %c0_i32_1 = arith.constant 0 : i32
    return %c0_i32, %c0_i32_0 : i32, i32
  }
  func.func @transform_4(%arg0: i32) -> (i32, i32) {
    %c0_i32 = arith.constant 0 : i32
    %c0_i32_0 = arith.constant 0 : i32
    %c0_i32_1 = arith.constant 0 : i32
    return %c0_i32, %c0_i32_0 : i32, i32
  }
  func.func @transform_5(%arg0: i32) -> (i32, i32) {
    %c0_i32 = arith.constant 0 : i32
    %c0_i32_0 = arith.constant 0 : i32
    return %arg0, %c0_i32 : i32, i32
  }
}

</mosaic_0001>

<llo_original>
// kernel: protonet_head.1
$region0: #{protonet_head.1}
  #allocation0 [shape = 'u32[]', space=smem, size = 0x4, offset = 0x4, fixed_abs, tag = 'smem constant byte address 0x4 - core index']
  #allocation1 [shape = 'u32[144,128]{1,0:T(1,128)}', space=vmem, size = 0x12000, scoped, tag = 'internal scratch']
  %s0 = inlined_call_operand.vmem [shape: bf16[8,32], index: 0, kind: input, shape index: {}]
  %s1 = inlined_call_operand.vmem [shape: bf16[32,32], index: 1, kind: input, shape index: {}]
  %s2 = inlined_call_operand.vmem [shape: f32[1,32], index: 2, kind: input, shape index: {}]
  %s3 = inlined_call_operand.vmem [shape: bf16[32,128], index: 3, kind: input, shape index: {}]
  %s4 = inlined_call_operand.vmem [shape: f32[1,128], index: 4, kind: input, shape index: {}]
  %s5 = inlined_call_operand.vmem [shape: f32[8,128], index: 5, kind: output, shape index: {}]
  %s6 = sld [smem:[#allocation0]]
  $region30: #{protonet_head.1} parent=0
    _
  %s8 = ssub.s32 1, %s6
  %s9 = scalar_select 0, %s8, %s6
  // Predicated region
  $region2: #{protonet_head.1} parent=0 // pred_check
    _
  $region3: #{protonet_head.1} parent=0 // pred_check_branch
    %11 = sbr.rel (0) target = $region5
  $region4: #{protonet_head.1} parent=0 // pred_region
    _
  $region5: #{protonet_head.1} parent=0 // pred_fallthru
    _
  // Predicated region
  $region6: #{protonet_head.1} parent=0 // pred_check
    _
  $region7: #{protonet_head.1} parent=0 // pred_check_branch
    %13 = sbr.rel (0) target = $region9
  $region8: #{protonet_head.1} parent=0 // pred_region
    _
  $region9: #{protonet_head.1} parent=0 // pred_fallthru
    _
  // Predicated region
  $region10: #{protonet_head.1} parent=0 // pred_check
    _
  $region11: #{protonet_head.1} parent=0 // pred_check_branch
    %15 = sbr.rel (0) target = $region13
  $region12: #{protonet_head.1} parent=0 // pred_region
    _
  $region13: #{protonet_head.1} parent=0 // pred_fallthru
    _
  // Predicated region
  $region14: #{protonet_head.1} parent=0 // pred_check
    _
  $region15: #{protonet_head.1} parent=0 // pred_check_branch
    %17 = sbr.rel (0) target = $region17
  $region16: #{protonet_head.1} parent=0 // pred_region
    _
  $region17: #{protonet_head.1} parent=0 // pred_fallthru
    _
  // Predicated region
  $region18: #{protonet_head.1} parent=0 // pred_check
    _
  $region19: #{protonet_head.1} parent=0 // pred_check_branch
    %19 = sbr.rel (0) target = $region21
  $region20: #{protonet_head.1} parent=0 // pred_region
    _
  $region21: #{protonet_head.1} parent=0 // pred_fallthru
    _
  %v21 = vld [vmem:[%s0] sm:$0xf]
  %v22 = vld [vmem:[%s1] sm:$0xf]
  %v23 = vld [vmem:[%s1 + $0x4] sm:$0xf]
  %v24 = vld [vmem:[%s1 + $0x8] sm:$0xf]
  %v25 = vld [vmem:[%s1 + $0xc] sm:$0xf]
  %v26 = vld [vmem:[%s2] sm:$0x1]
  %v28 = vlaneseq
  %v29 = vshrl.u32 %v28, 7
  %v30 = vsub.s32 0, %v29
  %v31 = vrot.slane %v26, %v30
  %v37 = vunpack.c.l.b16 %v22
  %v38 = vunpack.c.l.b16 %v23
  %v39 = vunpack.c.l.b16 %v24
  %v40 = vunpack.c.l.b16 %v25
  %v41 = vpack.c.b16 %v38, %v37
  %v42 = vpack.c.b16 %v40, %v39
  %vm45 = vcmask 261120
  %v47 = vsel %vm45, %v21, 0
  %49 = vmatprep.subr.bf16.mxu0 0
  %50 = vmatpush1.bf16.msra.mxu0 %v41
  %51 = vmatprep.subr.bf16.mxu0 0
  %52 = vmatpush1.bf16.msra.mxu0 %v42
  %53 = vmatprep.subr.bf16.mxu0 0
  %54 = vmatpush1.bf16.msra.mxu0 0
  %55 = vmatprep.subr.bf16.mxu0 0
  %56 = vmatpush1.bf16.msra.mxu0 0
  %57 = vmatprep.subr.bf16.mxu0 0
  %58 = vmatpush1.bf16.msra.mxu0 0
  %59 = vmatprep.subr.bf16.mxu0 0
  %60 = vmatpush1.bf16.msra.mxu0 0
  %61 = vmatprep.subr.bf16.mxu0 0
  %62 = vmatpush1.bf16.msra.mxu0 0
  %63 = vmatprep.subr.bf16.mxu0 0
  %64 = vmatpush1.bf16.msra.mxu0 0
  %65 = vmatprep.subr.bf16.mxu0 0
  %66 = vmatpush1.bf16.msra.mxu0 0
  %67 = vmatprep.subr.bf16.mxu0 0
  %68 = vmatpush1.bf16.msra.mxu0 0
  %69 = vmatprep.subr.bf16.mxu0 0
  %70 = vmatpush1.bf16.msra.mxu0 0
  %71 = vmatprep.subr.bf16.mxu0 0
  %72 = vmatpush1.bf16.msra.mxu0 0
  %73 = vmatprep.subr.bf16.mxu0 0
  %74 = vmatpush1.bf16.msra.mxu0 0
  %75 = vmatprep.subr.bf16.mxu0 0
  %76 = vmatpush1.bf16.msra.mxu0 0
  %77 = vmatprep.subr.bf16.mxu0 0
  %78 = vmatpush1.bf16.msra.mxu0 0
  %79 = vmatprep.subr.bf16.mxu0 0
  %80 = vmatpush1.bf16.msra.mxu0 0
  %81 = vmatprep.mubr.bf16.mxu0 0
  %82 = vmatmul.mubr.bf16.gmra.mrb[0].mxu0 %v47
  %v83 = vpop.f32.mrb[0].mxu0
  %v84 = vadd.f32 %v31, %v83
  %v85 = vpop.f32.mrb[0].mxu0
  %v86 = vpop.f32.mrb[0].mxu0
  %v87 = vpop.f32.mrb[0].mxu0
  %88 = vdwg.mxu0
  %v89 = vtanh.pop %v84
  %v90 = vpack.c.bf16 %v89, %v89
  %v91 = vld [vmem:[%s3] sm:$0xf]
  %v92 = vld [vmem:[%s3 + $0x4] sm:$0xf]
  %v93 = vld [vmem:[%s3 + $0x8] sm:$0xf]
  %v94 = vld [vmem:[%s3 + $0xc] sm:$0xf]
  %v95 = vld [vmem:[%s4] sm:$0x1]
  %v97 = vlaneseq
  %v98 = vshrl.u32 %v97, 7
  %v99 = vsub.s32 0, %v98
  %v100 = vrot.slane %v95, %v99
  %v106 = vunpack.c.l.b16 %v91
  %v107 = vunpack.c.l.b16 %v92
  %v108 = vunpack.c.l.b16 %v93
  %v109 = vunpack.c.l.b16 %v94
  %v110 = vpack.c.b16 %v107, %v106
  %v111 = vpack.c.b16 %v109, %v108
  %v115 = vsel %vm45, %v90, 0
  %117 = vmatprep.subr.bf16.mxu0 0
  %118 = vmatpush1.bf16.msra.mxu0 %v110
  %119 = vmatprep.subr.bf16.mxu0 0
  %120 = vmatpush1.bf16.msra.mxu0 %v111
  %121 = vmatprep.subr.bf16.mxu0 0
  %122 = vmatpush1.bf16.msra.mxu0 0
  %123 = vmatprep.subr.bf16.mxu0 0
  %124 = vmatpush1.bf16.msra.mxu0 0
  %125 = vmatprep.subr.bf16.mxu0 0
  %126 = vmatpush1.bf16.msra.mxu0 0
  %127 = vmatprep.subr.bf16.mxu0 0
  %128 = vmatpush1.bf16.msra.mxu0 0
  %129 = vmatprep.subr.bf16.mxu0 0
  %130 = vmatpush1.bf16.msra.mxu0 0
  %131 = vmatprep.subr.bf16.mxu0 0
  %132 = vmatpush1.bf16.msra.mxu0 0
  %133 = vmatprep.subr.bf16.mxu0 0
  %134 = vmatpush1.bf16.msra.mxu0 0
  %135 = vmatprep.subr.bf16.mxu0 0
  %136 = vmatpush1.bf16.msra.mxu0 0
  %137 = vmatprep.subr.bf16.mxu0 0
  %138 = vmatpush1.bf16.msra.mxu0 0
  %139 = vmatprep.subr.bf16.mxu0 0
  %140 = vmatpush1.bf16.msra.mxu0 0
  %141 = vmatprep.subr.bf16.mxu0 0
  %142 = vmatpush1.bf16.msra.mxu0 0
  %143 = vmatprep.subr.bf16.mxu0 0
  %144 = vmatpush1.bf16.msra.mxu0 0
  %145 = vmatprep.subr.bf16.mxu0 0
  %146 = vmatpush1.bf16.msra.mxu0 0
  %147 = vmatprep.subr.bf16.mxu0 0
  %148 = vmatpush1.bf16.msra.mxu0 0
  %149 = vmatprep.mubr.bf16.mxu0 0
  %150 = vmatmul.mubr.bf16.gmra.mrb[0].mxu0 %v115
  %v151 = vpop.f32.mrb[0].mxu0
  %v152 = vadd.f32 %v100, %v151
  %v153 = vpop.f32.mrb[0].mxu0
  %v154 = vpop.f32.mrb[0].mxu0
  %v155 = vpop.f32.mrb[0].mxu0
  %156 = vdwg.mxu0
  %157 = vst [vmem:[%s5] sm:$0xff] %v152
  // Predicated region
  $region22: #{protonet_head.1} parent=0 // pred_check
    _
  $region23: #{protonet_head.1} parent=0 // pred_check_branch
    %159 = sbr.rel (0) target = $region25
  $region24: #{protonet_head.1} parent=0 // pred_region
    _
  $region25: #{protonet_head.1} parent=0 // pred_fallthru
    _
  // Predicated region
  $region26: #{protonet_head.1} parent=0 // pred_check
    _
  $region27: #{protonet_head.1} parent=0 // pred_check_branch
    %161 = sbr.rel (0) target = $region29
  $region28: #{protonet_head.1} parent=0 // pred_region
    _
  $region29: #{protonet_head.1} parent=0 // pred_fallthru
    _

</llo_original>
